<compile_context>
chip_gen: v7x
topology: tpu7x:2x2x1
jax: 0.10.0
libtpu: 0.0.40
codegen_flags: <defaults>
</compile_context>

<pallas_src>
import functools

import jax
import jax.numpy as jnp
from jax import lax
from jax.experimental import pallas as pl
from jax.experimental.pallas import tpu as pltpu

EPS = 1e-5  # torch.nn.BatchNorm2d default eps


# ----------------------------------------------------------------------------
# Kernel 1: MXU matmul  (Cout, K) @ (K, M) -> (Cout, M)
# Used for both 3x3 convs (via im2col) and the 1x1 downsample conv.
# ----------------------------------------------------------------------------
def _matmul_kernel(w_ref, p_ref, o_ref):
    o_ref[...] = jnp.dot(
        w_ref[...].astype(jnp.float32),
        p_ref[...].astype(jnp.float32),
        preferred_element_type=jnp.float32,
    ).astype(o_ref.dtype)


def _pick_lane_block(m, target=256):
    """Largest multiple of 128 that divides m, capped at `target` (keeps >=2
    'parallel' grid steps when m allows, so both v7x TensorCores get work)."""
    if m % 128 != 0:
        return m
    blk = min(target, m)
    while m % blk:
        blk -= 128
    return blk


def matmul_cm(w_mat, patches, out_dtype=jnp.float32):
    cout, k = w_mat.shape
    k2, m = patches.shape
    assert k == k2
    m_blk = _pick_lane_block(m)
    grid = (m // m_blk,)
    return pl.pallas_call(
        _matmul_kernel,
        out_shape=jax.ShapeDtypeStruct((cout, m), out_dtype),
        grid_spec=pltpu.PrefetchScalarGridSpec(
            num_scalar_prefetch=0,
            grid=grid,
            in_specs=[
                pl.BlockSpec((cout, k), lambda j: (0, 0)),   # weights stay resident
                pl.BlockSpec((k, m_blk), lambda j: (0, j)),  # lane-dense patch slab
            ],
            out_specs=pl.BlockSpec((cout, m_blk), lambda j: (0, j)),
        ),
        compiler_params=pltpu.CompilerParams(
            dimension_semantics=("parallel",),
        ),
    )(w_mat, patches)


# ----------------------------------------------------------------------------
# Kernel 2: fused train-mode BatchNorm2d (+ optional residual add) (+ ReLU).
# Input layout (C, M): channels on sublanes, flattened N*H*W on lanes, so the
# per-channel statistic is a per-row reduction over a lane-dense slab.
# ----------------------------------------------------------------------------
def _bn_core(x_ref, res_ref, gamma_ref, beta_ref, o_ref, inv_m, relu):
    x = x_ref[...].astype(jnp.float32)                # (c_blk, M)
    s = jnp.sum(x, axis=1, keepdims=True)             # single-pass stats:
    ss = jnp.sum(x * x, axis=1, keepdims=True)        #   sum and sum-of-squares
    mean = s * inv_m
    var = jnp.maximum(ss * inv_m - mean * mean, 0.0)  # biased var (÷N), like torch BN
    inv_std = lax.rsqrt(var + EPS)                    # EUP slot (nearly free)
    gamma = gamma_ref[...][:, 0:1]                    # (c_blk, 1)
    beta = beta_ref[...][:, 0:1]
    scale = gamma * inv_std
    shift = beta - mean * scale
    y = x * scale + shift                             # one fused affine pass
    if res_ref is not None:
        y = y + res_ref[...].astype(jnp.float32)
    if relu:
        y = jnp.maximum(y, 0.0)
    o_ref[...] = y.astype(o_ref.dtype)


def _bn_act_kernel(x_ref, gamma_ref, beta_ref, o_ref, *, inv_m, relu):
    _bn_core(x_ref, None, gamma_ref, beta_ref, o_ref, inv_m, relu)


def _bn_add_act_kernel(x_ref, res_ref, gamma_ref, beta_ref, o_ref, *, inv_m, relu):
    _bn_core(x_ref, res_ref, gamma_ref, beta_ref, o_ref, inv_m, relu)


def batch_norm_act_cm(x_cm, gamma, beta, *, residual=None, relu=True):
    """x_cm: (C, M); gamma/beta: (C,). Per-channel batch stats over all M."""
    c, m = x_cm.shape
    c_blk = 8 if c % 8 == 0 else c
    grid = (c // c_blk,)
    inv_m = 1.0 / float(m)
    # Pre-broadcast gamma/beta to a lane-dense (C, 128) slab in the wrapper:
    # unmasked loads, no per-step two-scalar DMAs, no in-kernel re-broadcast.
    gamma_b = jnp.broadcast_to(gamma.astype(jnp.float32).reshape(c, 1), (c, 128))
    beta_b = jnp.broadcast_to(beta.astype(jnp.float32).reshape(c, 1), (c, 128))

    x_spec = pl.BlockSpec((c_blk, m), lambda i: (i, 0))
    p_spec = pl.BlockSpec((c_blk, 128), lambda i: (i, 0))

    if residual is None:
        kernel = functools.partial(_bn_act_kernel, inv_m=inv_m, relu=relu)
        in_specs = [x_spec, p_spec, p_spec]
        args = (x_cm, gamma_b, beta_b)
    else:
        kernel = functools.partial(_bn_add_act_kernel, inv_m=inv_m, relu=relu)
        in_specs = [x_spec, x_spec, p_spec, p_spec]
        args = (x_cm, residual, gamma_b, beta_b)

    return pl.pallas_call(
        kernel,
        out_shape=jax.ShapeDtypeStruct((c, m), x_cm.dtype),
        grid_spec=pltpu.PrefetchScalarGridSpec(
            num_scalar_prefetch=0,
            grid=grid,
            in_specs=in_specs,
            out_specs=x_spec,
        ),
        compiler_params=pltpu.CompilerParams(
            dimension_semantics=("parallel",),
        ),
    )(*args)


# ----------------------------------------------------------------------------
# Wrapper-side layout plumbing + full ResNetBlock forward.
# ----------------------------------------------------------------------------
def _im2col(x_nchw, ksize, stride, pad):
    """Conv patches as (Cin*k*k, N*Ho*Wo). Row order (cin, ky, kx) matches
    w.reshape(Cout, -1); column order is (n, ho, wo)."""
    n, c, h, w = x_nchw.shape
    ho = (h + 2 * pad - ksize) // stride + 1
    wo = (w + 2 * pad - ksize) // stride + 1
    xp = jnp.pad(x_nchw, ((0, 0), (0, 0), (pad, pad), (pad, pad)))
    taps = []
    for dy in range(ksize):
        for dx in range(ksize):
            taps.append(xp[:, :, dy:dy + stride * ho:stride, dx:dx + stride * wo:stride])
    cols = jnp.stack(taps, axis=0)          # (k*k, N, C, Ho, Wo)
    cols = cols.transpose(2, 0, 1, 3, 4)    # (C, k*k, N, Ho, Wo)
    return cols.reshape(c * ksize * ksize, n * ho * wo), (n, ho, wo)


def resnet_block_forward(x, params, *, stride=1):
    """Pallas forward of the PyTorch ResNetBlock (BatchNorm2d default forward:
    per-channel batch statistics, biased variance, eps=1e-5)."""
    # TODO(synk): at production feature-map sizes, do the im2col gather and the
    # conv->BN handoff with in-kernel DMA instead of materializing the 9x patch
    # slab in HBM via XLA.
    n, cin, h, w = x.shape
    w1, w2 = params["w1"], params["w2"]
    cout = w1.shape[0]

    # conv1 (3x3, stride, pad=1) -> channel-major (Cout, M)
    p1, (n_, ho, wo) = _im2col(x, 3, stride, 1)
    o = matmul_cm(w1.reshape(cout, cin * 9), p1)
    # bn1 + ReLU, fused
    o = batch_norm_act_cm(o, params["g1"], params["b1"], relu=True)

    # conv2 (3x3, stride 1, pad=1)
    o_nchw = o.reshape(cout, n_, ho, wo).transpose(1, 0, 2, 3)
    p2, _ = _im2col(o_nchw, 3, 1, 1)
    o = matmul_cm(w2.reshape(cout, cout * 9), p2)

    # residual branch
    if stride != 1:
        pr, _ = _im2col(x, 1, stride, 0)                     # (Cin, M)
        r = matmul_cm(params["wd"].reshape(cout, cin), pr)   # 1x1 conv
        r = batch_norm_act_cm(r, params["gd"], params["bd"], relu=False)
    else:
        assert cin == cout, "identity residual needs in_channels == out_channels"
        r = x.transpose(1, 0, 2, 3).reshape(cin, n * h * w)

    # bn2 + residual add + ReLU, fused in one kernel
    o = batch_norm_act_cm(o, params["g2"], params["b2"], residual=r, relu=True)
    return o.reshape(cout, n_, ho, wo).transpose(1, 0, 2, 3)


# ----------------------------------------------------------------------------
# Pure-JAX reference (lax.conv + manual BN), for correctness checking only.
# ----------------------------------------------------------------------------
def _conv_ref(x, w, stride, pad):
    return lax.conv_general_dilated(
        x, w, window_strides=(stride, stride), padding=((pad, pad), (pad, pad)),
        dimension_numbers=("NCHW", "OIHW", "NCHW"),
        precision=lax.Precision.HIGHEST)


def _bn_ref(x, gamma, beta):
    mean = jnp.mean(x, axis=(0, 2, 3), keepdims=True)
    var = jnp.var(x, axis=(0, 2, 3), keepdims=True)   # biased, like torch BN forward
    xn = (x - mean) * lax.rsqrt(var + EPS)
    return xn * gamma.reshape(1, -1, 1, 1) + beta.reshape(1, -1, 1, 1)


def resnet_block_ref(x, params, *, stride=1):
    o = _conv_ref(x, params["w1"], stride, 1)
    o = jnp.maximum(_bn_ref(o, params["g1"], params["b1"]), 0.0)
    o = _conv_ref(o, params["w2"], 1, 1)
    o = _bn_ref(o, params["g2"], params["b2"])
    if stride != 1:
        x = _conv_ref(x, params["wd"], stride, 0)
        x = _bn_ref(x, params["gd"], params["bd"])
    return jnp.maximum(o + x, 0.0)


if __name__ == "__main__":
    key = jax.random.PRNGKey(0)

    def run_case(case_key, n, cin, cout, h, w, stride):
        ks = jax.random.split(case_key, 4)
        x = jax.random.normal(ks[0], (n, cin, h, w), dtype=jnp.float32)
        # BatchNorm2d __init__: weight=1, bias=0 (deterministic); conv weights random.
        params = {
            "w1": jax.random.normal(ks[1], (cout, cin, 3, 3), jnp.float32) * 0.1,
            "g1": jnp.ones((cout,), jnp.float32),
            "b1": jnp.zeros((cout,), jnp.float32),
            "w2": jax.random.normal(ks[2], (cout, cout, 3, 3), jnp.float32) * 0.1,
            "g2": jnp.ones((cout,), jnp.float32),
            "b2": jnp.zeros((cout,), jnp.float32),
        }
        if stride != 1:
            params["wd"] = jax.random.normal(ks[3], (cout, cin, 1, 1), jnp.float32) * 0.1
            params["gd"] = jnp.ones((cout,), jnp.float32)
            params["bd"] = jnp.zeros((cout,), jnp.float32)

        out = resnet_block_forward(x, params, stride=stride)
        out = jax.block_until_ready(out)
        ref = resnet_block_ref(x, params, stride=stride)
        assert out.shape == ref.shape
        assert jnp.allclose(out, ref, atol=1e-2, rtol=1e-2), \
            float(jnp.max(jnp.abs(out - ref)))
        return out

    k1, k2 = jax.random.split(key)
    run_case(k1, n=2, cin=16, cout=16, h=16, w=16, stride=1)  # identity residual path
    run_case(k2, n=2, cin=16, cout=32, h=16, w=16, stride=2)  # conv1x1 downsample path
    print("KERNEL_OK")
</pallas_src>

<mosaic_0001>
module attributes {stable_mosaic.version = 11 : i64} {
  func.func @_matmul_kernel(%arg0: i32, %arg1: memref<16x144xf32, #tpu.memory_space<vmem>>, %arg2: memref<144x256xf32, #tpu.memory_space<vmem>>, %arg3: memref<16x256xf32, #tpu.memory_space<vmem>>) attributes {dimension_semantics = [#tpu.dimension_semantics<parallel>], iteration_bounds = array<i64: 2>, scalar_prefetch = 0 : i64, scratch_operands = 0 : i64, tpu.core_type = #tpu.core_type<tc>, window_params = [{pipeline_mode = #tpu.pipeline_mode<synchronous>, transform_indices = @transform_0, window_bounds = array<i64: 16, 144>}, {transform_indices = @transform_1, window_bounds = array<i64: 144, 256>}, {transform_indices = @transform_2, window_bounds = array<i64: 16, 256>}]} {
    %c0 = arith.constant 0 : index
    %c0_0 = arith.constant 0 : index
    %0 = vector.load %arg1[%c0, %c0_0] : memref<16x144xf32, #tpu.memory_space<vmem>>, vector<16x144xf32>
    %c0_1 = arith.constant 0 : index
    %c0_2 = arith.constant 0 : index
    %1 = vector.load %arg2[%c0_1, %c0_2] : memref<144x256xf32, #tpu.memory_space<vmem>>, vector<144x256xf32>
    %cst = arith.constant dense<0.000000e+00> : vector<16x256xf32>
    %2 = tpu.matmul %0, %1, %cst {dimension_numbers = #tpu.dot_dimension_numbers<[1], [0], [0], [1], [0, 0, 1, 1], [], []>} : vector<16x144xf32>, vector<144x256xf32>, vector<16x256xf32> -> vector<16x256xf32>
    %c0_3 = arith.constant 0 : index
    %c0_4 = arith.constant 0 : index
    %3 = vector.load %arg3[%c0_3, %c0_4] : memref<16x256xf32, #tpu.memory_space<vmem>>, vector<16x256xf32>
    tpu.vector_store %arg3[%c0_3, %c0_4], %2 {strides = array<i32>} : memref<16x256xf32, #tpu.memory_space<vmem>>, vector<16x256xf32>,
    return
  }
  func.func @transform_0(%arg0: i32) -> (i32, i32) {
    %c0_i32 = arith.constant 0 : i32
    %c0_i32_0 = arith.constant 0 : i32
    %c0_i32_1 = arith.constant 0 : i32
    return %c0_i32, %c0_i32_0 : i32, i32
  }
  func.func @transform_1(%arg0: i32) -> (i32, i32) {
    %c0_i32 = arith.constant 0 : i32
    %c0_i32_0 = arith.constant 0 : i32
    return %c0_i32, %arg0 : i32, i32
  }
  func.func @transform_2(%arg0: i32) -> (i32, i32) {
    %c0_i32 = arith.constant 0 : i32
    %c0_i32_0 = arith.constant 0 : i32
    return %c0_i32, %arg0 : i32, i32
  }
}

</mosaic_0001>

<llo_original>
// kernel: tpu_custom_call.1
$region0: #{tpu_custom_call.1}
  #allocation0 [shape = 'u32[]', space=smem, size = 0x4, offset = 0x4, fixed_abs, tag = 'smem constant byte address 0x4 - core index']
  #allocation1 [shape = 'u32[144,128]{1,0:T(1,128)}', space=vmem, size = 0x12000, scoped, tag = 'internal scratch']
  %s0 = inlined_call_operand.hbm [shape: f32[16,144], index: 0, kind: input, shape index: {}]
  %s1 = inlined_call_operand.hbm [shape: f32[144,512], index: 1, kind: input, shape index: {}]
  %s2 = inlined_call_operand.hbm [shape: f32[16,512], index: 2, kind: output, shape index: {}]
  %s3 = sld [smem:[#allocation0]]
  $region49: #{tpu_custom_call.1} parent=0
    _
  %s5 = ssub.s32 1, %s3
  %s6 = scalar_select 0, %s5, %s3
  $region1: #{tpu_custom_call.1} parent=0
    #allocation2 [shape = 'u8[16384]{0}', space=vmem, size = 0x4000, scoped, tag = 'input window, operand 0, single buffered']
    #allocation3 [shape = 's32[2]{0}', space=sflag, size = 0x8, scoped, tag = 'scoped memory for tpu_custom_call.1']
    #allocation4 [shape = 's32[2]{0}', space=sflag, size = 0x8, scoped, tag = 'scoped memory for tpu_custom_call.1']
    #allocation5 [shape = 'u8[294912]{0}', space=vmem, size = 0x48000, scoped, tag = 'input window, operand 1']
    #allocation6 [shape = 's32[2]{0}', space=sflag, size = 0x8, scoped, tag = 'scoped memory for tpu_custom_call.1']
    #allocation7 [shape = 'u8[32768]{0}', space=vmem, size = 0x8000, scoped, tag = 'output window, operand 0']
    %7 = vsyncpa [#allocation3], 0
    %8 = vsyncpa [#allocation6], 0
    %s9 = scalar_lea.sflag [#allocation6], 1
    %10 = vsyncpa %s9, 0
    %11 = vsyncpa [#allocation4], 0
    %s12 = scalar_lea.sflag [#allocation4], 1
    %13 = vsyncpa %s12, 0
    loop: start=0, step=1, limit=4
    $region2: #{tpu_custom_call.1} parent=1 // loop_pre_header
      _
    $region3: #{tpu_custom_call.1} parent=1 // loop_header
      %s15 = sphi 0, %s19
      %p16 = scmp.ge.s32.totalorder %s15, 4
      %s23 = sphi 0, %s23
      %s25 = sphi 0, %s23
      %s26 = sphi 0, %s25
      %s40 = sphi 0, %s26
      %s46 = sphi 0, %s48
      %s49 = sphi 0, %s46
      %s50 = sphi 0, %s49
      %s66 = sphi 0, %s50
      %s72 = sphi 0, %s74
      %s75 = sphi 0, %s72
      %s76 = sphi 0, %s75
      %s92 = sphi 0, %s76
    $region4: #{tpu_custom_call.1} parent=1 // loop_header_branch
      %18 = sbr.rel (%p16) target = $region8
    $region5: #{tpu_custom_call.1} parent=1 // loop_body
      %s20 = ssub.s32 %s15, 1
      %s21 = ssub.s32 %s15, 2
      %s22 = sadd.s32 %s15, 1
      %s24 = sadd.s32 %s23, 1
      %p27 = scmp.eq.s32.totalorder %s15, 1
      %p28 = scmp.ne.s32.totalorder %s23, %s25
      %p29 = scmp.eq.s32.totalorder %s15, 0
      %p30 = por %p28, %p29
      %p31 = scmp.ne.s32.totalorder %s23, %s25
      %p32 = scmp.eq.s32.totalorder %s20, 1
      %p33 = por %p31, %p32
      %p34 = scmp.ne.s32.totalorder %s25, %s26
      %p35 = scmp.eq.s32.totalorder %s20, 0
      %p36 = por %p34, %p35
      %p37 = scmp.ne.s32.totalorder %s25, %s26
      %p38 = scmp.eq.s32.totalorder %s21, 1
      %p39 = por %p37, %p38
      %p41 = scmp.ne.s32.totalorder %s26, %s40
      %p42 = scmp.eq.s32.totalorder %s21, 0
      %p43 = por %p41, %p42
      %s44 = ssub.s32 %s15, %s22
      %p45 = scmp.eq.s32.totalorder %s44, 0
      %s47 = sadd.s32 %s46, 1
      %s48 = scalar_select %p45, %s46, %s47
      %p51 = pneg %p45
      %p52 = scmp.eq.s32.totalorder %s15, 1
      %p53 = por %p51, %p52
      %p54 = scmp.ne.s32.totalorder %s46, %s49
      %p55 = scmp.eq.s32.totalorder %s15, 0
      %p56 = por %p54, %p55
      %p57 = scmp.ne.s32.totalorder %s46, %s49
      %p58 = scmp.eq.s32.totalorder %s20, 1
      %p59 = por %p57, %p58
      %p60 = scmp.ne.s32.totalorder %s49, %s50
      %p61 = scmp.eq.s32.totalorder %s20, 0
      %p62 = por %p60, %p61
      %p63 = scmp.ne.s32.totalorder %s49, %s50
      %p64 = scmp.eq.s32.totalorder %s21, 1
      %p65 = por %p63, %p64
      %p67 = scmp.ne.s32.totalorder %s50, %s66
      %p68 = scmp.eq.s32.totalorder %s21, 0
      %p69 = por %p67, %p68
      %s70 = ssub.s32 %s15, %s22
      %p71 = scmp.eq.s32.totalorder %s70, 0
      %s73 = sadd.s32 %s72, 1
      %s74 = scalar_select %p71, %s72, %s73
      %p77 = pneg %p71
      %p78 = scmp.eq.s32.totalorder %s15, 1
      %p79 = por %p77, %p78
      %p80 = scmp.ne.s32.totalorder %s72, %s75
      %p81 = scmp.eq.s32.totalorder %s15, 0
      %p82 = por %p80, %p81
      %p83 = scmp.ne.s32.totalorder %s72, %s75
      %p84 = scmp.eq.s32.totalorder %s20, 1
      %p85 = por %p83, %p84
      %p86 = scmp.ne.s32.totalorder %s75, %s76
      %p87 = scmp.eq.s32.totalorder %s20, 0
      %p88 = por %p86, %p87
      %p89 = scmp.ne.s32.totalorder %s75, %s76
      %p90 = scmp.eq.s32.totalorder %s21, 1
      %p91 = por %p89, %p90
      %p93 = scmp.ne.s32.totalorder %s76, %s92
      %p94 = scmp.eq.s32.totalorder %s21, 0
      %p95 = por %p93, %p94
      %p96 = scmp.le.s32.totalorder 1, %s15
      %p97 = scmp.lt.s32.totalorder %s15, 3
      %p98 = pnand %p96, %p97
      %p99 = pneg %p98
      // Predicated region
      $region9: #{tpu_custom_call.1} parent=5 // pred_check
        _
      $region10: #{tpu_custom_call.1} parent=5 // pred_check_branch
        %101 = sbr.rel (%p98) target = $region12
      $region11: #{tpu_custom_call.1} parent=5 // pred_region
        %s102 = ssub.s32 %s15, 1
        // Predicated region
        $region13: #{tpu_custom_call.1} parent=11 // pred_check
          %p103 = pneg %p36
        $region14: #{tpu_custom_call.1} parent=11 // pred_check_branch
          %105 = sbr.rel (%p103) target = $region16
        $region15: #{tpu_custom_call.1} parent=11 // pred_region
          %s107 = ssub.s32 512, 512
          %108 = vsyncadd [#allocation3], %s107
          %s109 = sshll.u32 [#allocation2], 4
          %s110 = int_to_ptr.vmem [resolvable:$true] %s109
          %115 = dma.hbm_to_vmem [thread:$0]  %s0, 512, %s110, [#allocation3], 256, 256, 16
        $region16: #{tpu_custom_call.1} parent=11 // pred_fallthru
          _
      $region12: #{tpu_custom_call.1} parent=5 // pred_fallthru
        _
      %p116 = scmp.lt.s32.totalorder %s15, 2
      // Predicated region
      $region17: #{tpu_custom_call.1} parent=5 // pred_check
        %p117 = pneg %p116
      $region18: #{tpu_custom_call.1} parent=5 // pred_check_branch
        %119 = sbr.rel (%p117) target = $region20
      $region19: #{tpu_custom_call.1} parent=5 // pred_region
        // Predicated region
        $region21: #{tpu_custom_call.1} parent=19 // pred_check
          %p120 = pneg %p56
        $region22: #{tpu_custom_call.1} parent=19 // pred_check_branch
          %122 = sbr.rel (%p120) target = $region24
        $region23: #{tpu_custom_call.1} parent=19 // pred_region
          %s123 = sand.u32 %s46, 1
          %s124 = scalar_lea.sflag [#allocation6], %s123
          %s125 = sand.u32 %s46, 1
          %s126 = smul.addr %s125, 288
          %s127 = scalar_lea.vmem [#allocation5], %s126
          %s128 = smul.u32 2, %s15
          %s130 = ssub.s32 4608, 4608
          %131 = vsyncadd %s124, %s130
          %s132 = smul.addr %s128, 128
          %s133 = scalar_lea.hbm %s1, %s132
          %s134 = sshll.u32 %s127, 4
          %s135 = int_to_ptr.vmem [resolvable:$true] %s134
          %140 = dma.hbm_to_vmem [thread:$0]  %s133, 4608, %s135, %s124, 512, 256, 16
        $region24: #{tpu_custom_call.1} parent=19 // pred_fallthru
          _
      $region20: #{tpu_custom_call.1} parent=5 // pred_fallthru
        _
      %p141 = scmp.le.s32.totalorder 1, %s15
      %p142 = scmp.lt.s32.totalorder %s15, 3
      %p143 = pnand %p141, %p142
      %p144 = pneg %p143
      // Predicated region
      $region25: #{tpu_custom_call.1} parent=5 // pred_check
        _
      $region26: #{tpu_custom_call.1} parent=5 // pred_check_branch
        %146 = sbr.rel (%p143) target = $region28
      $region27: #{tpu_custom_call.1} parent=5 // pred_region
        %s147 = ssub.s32 %s15, 1
        // Predicated region
        $region29: #{tpu_custom_call.1} parent=27 // pred_check
          %p148 = pneg %p36
        $region30: #{tpu_custom_call.1} parent=27 // pred_check_branch
          %150 = sbr.rel (%p148) target = $region32
        $region31: #{tpu_custom_call.1} parent=27 // pred_region
          %151 = dma.done [#allocation3], 512
        $region32: #{tpu_custom_call.1} parent=27 // pred_fallthru
          _
        %s152 = sand.u32 %s49, 1
        %s153 = scalar_lea.sflag [#allocation6], %s152
        %s154 = sand.u32 %s49, 1
        %s155 = smul.addr %s154, 288
        %s156 = scalar_lea.vmem [#allocation5], %s155
        // Predicated region
        $region33: #{tpu_custom_call.1} parent=27 // pred_check
          %p157 = pneg %p62
        $region34: #{tpu_custom_call.1} parent=27 // pred_check_branch
          %159 = sbr.rel (%p157) target = $region36
        $region35: #{tpu_custom_call.1} parent=27 // pred_region
          %160 = dma.done %s153, 4608
        $region36: #{tpu_custom_call.1} parent=27 // pred_fallthru
          _
        %p161 = pneg %p36
        %p162 = pneg %p33
        %s163 = sand.u32 %s49, 1
        %s164 = scalar_lea.sflag [#allocation6], %s163
        %s165 = sand.u32 %s49, 1
        %s166 = smul.addr %s165, 288
        %s167 = scalar_lea.vmem [#allocation5], %s166
        %p168 = pneg %p62
        %p169 = pneg %p59
        %p170 = pneg %p88
        %p171 = pneg %p85
        %s172 = sand.u32 %s75, 1
        %s173 = scalar_lea.sflag [#allocation4], %s172
        %s174 = sand.u32 %s75, 1
        %s175 = smul.addr %s174, 32
        %s176 = scalar_lea.vmem [#allocation7], %s175
        %s177 = smul.u32 2, %s20
        %s178 = smul.u32 2, %s20
        %v179 = vld [vmem:[#allocation2] sm:$0xff]
        %v180 = vld [vmem:[#allocation2 + $0x8] sm:$0xff]
        %v181 = vld [vmem:[#allocation2 + $0x10] sm:$0xff]
        %v182 = vld [vmem:[#allocation2 + $0x18] sm:$0xff]
        %v183 = vld [vmem:[%s156] sm:$0xff]
        %v184 = vld [vmem:[%s156 + $0x8] sm:$0xff]
        %v185 = vld [vmem:[%s156 + $0x10] sm:$0xff]
        %v186 = vld [vmem:[%s156 + $0x18] sm:$0xff]
        %v187 = vld [vmem:[%s156 + $0x20] sm:$0xff]
        %v188 = vld [vmem:[%s156 + $0x28] sm:$0xff]
        %v189 = vld [vmem:[%s156 + $0x30] sm:$0xff]
        %v190 = vld [vmem:[%s156 + $0x38] sm:$0xff]
        %v191 = vld [vmem:[%s156 + $0x40] sm:$0xff]
        %v192 = vld [vmem:[%s156 + $0x48] sm:$0xff]
        %v193 = vld [vmem:[%s156 + $0x50] sm:$0xff]
        %v194 = vld [vmem:[%s156 + $0x58] sm:$0xff]
        %v195 = vld [vmem:[%s156 + $0x60] sm:$0xff]
        %v196 = vld [vmem:[%s156 + $0x68] sm:$0xff]
        %v197 = vld [vmem:[%s156 + $0x70] sm:$0xff]
        %v198 = vld [vmem:[%s156 + $0x78] sm:$0xff]
        %v199 = vld [vmem:[%s156 + $0x80] sm:$0xff]
        %v200 = vld [vmem:[%s156 + $0x88] sm:$0xff]
        %v201 = vld [vmem:[%s156 + $0x90] sm:$0xff]
        %v202 = vld [vmem:[%s156 + $0x98] sm:$0xff]
        %v203 = vld [vmem:[%s156 + $0xa0] sm:$0xff]
        %v204 = vld [vmem:[%s156 + $0xa8] sm:$0xff]
        %v205 = vld [vmem:[%s156 + $0xb0] sm:$0xff]
        %v206 = vld [vmem:[%s156 + $0xb8] sm:$0xff]
        %v207 = vld [vmem:[%s156 + $0xc0] sm:$0xff]
        %v208 = vld [vmem:[%s156 + $0xc8] sm:$0xff]
        %v209 = vld [vmem:[%s156 + $0xd0] sm:$0xff]
        %v210 = vld [vmem:[%s156 + $0xd8] sm:$0xff]
        %v211 = vld [vmem:[%s156 + $0xe0] sm:$0xff]
        %v212 = vld [vmem:[%s156 + $0xe8] sm:$0xff]
        %v213 = vld [vmem:[%s156 + $0xf0] sm:$0xff]
        %v214 = vld [vmem:[%s156 + $0xf8] sm:$0xff]
        %v215 = vld [vmem:[%s156 + $0x100] sm:$0xff]
        %v216 = vld [vmem:[%s156 + $0x108] sm:$0xff]
        %v217 = vld [vmem:[%s156 + $0x110] sm:$0xff]
        %v218 = vld [vmem:[%s156 + $0x118] sm:$0xff]
        %vm219 = vcmask 130048
        %v221 = vsel %vm219, %v180, 0
        %v224 = vsel %vm219, %v182, 0
        %226 = vmatprep.subr.mxu0 %v184
        %227 = vmatpush1.msra.mxu0 %v183
        %228 = vmatprep.subr.mxu0 %v186
        %229 = vmatpush1.msra.mxu0 %v185
        %230 = vmatprep.subr.mxu0 %v188
        %231 = vmatpush1.msra.mxu0 %v187
        %232 = vmatprep.subr.mxu0 %v190
        %233 = vmatpush1.msra.mxu0 %v189
        %234 = vmatprep.subr.mxu0 %v192
        %235 = vmatpush1.msra.mxu0 %v191
        %236 = vmatprep.subr.mxu0 %v194
        %237 = vmatpush1.msra.mxu0 %v193
        %238 = vmatprep.subr.mxu0 %v196
        %239 = vmatpush1.msra.mxu0 %v195
        %240 = vmatprep.subr.mxu0 %v198
        %241 = vmatpush1.msra.mxu0 %v197
        %242 = vmatprep.subr.mxu0 %v200
        %243 = vmatpush1.msra.mxu0 %v199
        %244 = vmatprep.subr.mxu0 %v202
        %245 = vmatpush1.msra.mxu0 %v201
        %246 = vmatprep.subr.mxu0 %v204
        %247 = vmatpush1.msra.mxu0 %v203
        %248 = vmatprep.subr.mxu0 %v206
        %249 = vmatpush1.msra.mxu0 %v205
        %250 = vmatprep.subr.mxu0 %v208
        %251 = vmatpush1.msra.mxu0 %v207
        %252 = vmatprep.subr.mxu0 %v210
        %253 = vmatpush1.msra.mxu0 %v209
        %254 = vmatprep.subr.mxu0 %v212
        %255 = vmatpush1.msra.mxu0 %v211
        %256 = vmatprep.subr.mxu0 %v214
        %257 = vmatpush1.msra.mxu0 %v213
        %258 = vmatprep.subr.mxu0 %v216
        %259 = vmatpush1.msra.mxu0 %v215
        %260 = vmatprep.subr.mxu0 %v218
        %261 = vmatpush1.msra.mxu0 %v217
        %262 = vmatprep.subr.mxu0 0.0
        %263 = vmatpush1.msra.mxu0 0.0
        %264 = vmatprep.subr.mxu0 0.0
        %265 = vmatpush1.msra.mxu0 0.0
        %266 = vmatprep.subr.mxu0 0.0
        %267 = vmatpush1.msra.mxu0 0.0
        %268 = vmatprep.subr.mxu0 0.0
        %269 = vmatpush1.msra.mxu0 0.0
        %270 = vmatprep.subr.mxu0 0.0
        %271 = vmatpush1.msra.mxu0 0.0
        %272 = vmatprep.subr.mxu0 0.0
        %273 = vmatpush1.msra.mxu0 0.0
        %274 = vmatprep.subr.mxu0 0.0
        %275 = vmatpush1.msra.mxu0 0.0
        %276 = vmatprep.subr.mxu0 0.0
        %277 = vmatpush1.msra.mxu0 0.0
        %278 = vmatprep.subr.mxu0 0.0
        %279 = vmatpush1.msra.mxu0 0.0
        %280 = vmatprep.subr.mxu0 0.0
        %281 = vmatpush1.msra.mxu0 0.0
        %282 = vmatprep.subr.mxu0 0.0
        %283 = vmatpush1.msra.mxu0 0.0
        %284 = vmatprep.subr.mxu0 0.0
        %285 = vmatpush1.msra.mxu0 0.0
        %286 = vmatprep.subr.mxu0 0.0
        %287 = vmatpush1.msra.mxu0 0.0
        %288 = vmatprep.subr.mxu0 0.0
        %289 = vmatpush1.msra.mxu0 0.0
        %290 = vmatprep.mubr.f32.mxu0 %v221
        %291 = vmatmul.mubr.f32.gmra.mrb[0].mxu0 %v179
        %v292 = vpop.f32.mrb[0].mxu0
        %v293 = vadd.f32 0.0, %v292
        %v294 = vpop.f32.mrb[0].mxu0
        %v295 = vadd.f32 0.0, %v294
        %296 = vmatprep.mubr.f32.mxu0 %v224
        %297 = vmatmul.mubr.f32.gmra.mrb[0].mxu0 %v181
        %v298 = vpop.f32.mrb[0].mxu0
        %v299 = vadd.f32 0.0, %v298
        %v300 = vpop.f32.mrb[0].mxu0
        %v301 = vadd.f32 0.0, %v300
        %302 = vdwg.mxu0
        %303 = vst [vmem:[%s176] sm:$0xff] %v293
        %304 = vst [vmem:[%s176 + $0x8] sm:$0xff] %v295
        %305 = vst [vmem:[%s176 + $0x10] sm:$0xff] %v299
        %306 = vst [vmem:[%s176 + $0x18] sm:$0xff] %v301
        %s307 = sand.u32 %s75, 1
        %s308 = scalar_lea.sflag [#allocation4], %s307
        %s309 = sand.u32 %s75, 1
        %s310 = smul.addr %s309, 32
        %s311 = scalar_lea.vmem [#allocation7], %s310
        // Predicated region
        $region37: #{tpu_custom_call.1} parent=27 // pred_check
          %p312 = pneg %p85
        $region38: #{tpu_custom_call.1} parent=27 // pred_check_branch
          %314 = sbr.rel (%p312) target = $region40
        $region39: #{tpu_custom_call.1} parent=27 // pred_region
          %s315 = smul.u32 2, %s20
          %s317 = ssub.s32 512, 512
          %318 = vsyncadd %s308, %s317
          %s319 = smul.addr %s315, 128
          %s320 = scalar_lea.hbm %s2, %s319
          %s321 = sshll.u32 %s311, 4
          %s322 = int_to_ptr.vmem [resolvable:$true] %s321
          %327 = dma.vmem_to_hbm [thread:$0]  %s322, 512, %s320, %s308, 256, 512, 16
        $region40: #{tpu_custom_call.1} parent=27 // pred_fallthru
          _
      $region28: #{tpu_custom_call.1} parent=5 // pred_fallthru
        _
      %p328 = scmp.le.s32.totalorder 2, %s15
      // Predicated region
      $region41: #{tpu_custom_call.1} parent=5 // pred_check
        %p329 = pneg %p328
      $region42: #{tpu_custom_call.1} parent=5 // pred_check_branch
        %331 = sbr.rel (%p329) target = $region44
      $region43: #{tpu_custom_call.1} parent=5 // pred_region
        %s332 = ssub.s32 %s15, 2
        // Predicated region
        $region45: #{tpu_custom_call.1} parent=43 // pred_check
          %p333 = pneg %p91
        $region46: #{tpu_custom_call.1} parent=43 // pred_check_branch
          %335 = sbr.rel (%p333) target = $region48
        $region47: #{tpu_custom_call.1} parent=43 // pred_region
          %s336 = sand.u32 %s76, 1
          %s337 = scalar_lea.sflag [#allocation4], %s336
          %s338 = sand.u32 %s76, 1
          %s339 = smul.addr %s338, 32
          %s340 = scalar_lea.vmem [#allocation7], %s339
          %341 = dma.done %s337, 512
        $region48: #{tpu_custom_call.1} parent=43 // pred_fallthru
          _
      $region44: #{tpu_custom_call.1} parent=5 // pred_fallthru
        _
    $region6: #{tpu_custom_call.1} parent=1 // loop_footer
      %s19 = sadd.s32 1, %s15
    $region7: #{tpu_custom_call.1} parent=1 // loop_footer_branch
      %14 = sbr.rel target = $region3
    $region8: #{tpu_custom_call.1} parent=1 // loop_exit
      _
    %342 = vsyncpa [#allocation3], 1
    %s343 = scalar_lea.sflag [#allocation3], 1
    %344 = vsyncpa %s343, 1
    %345 = vsyncpa [#allocation6], 1
    %s346 = scalar_lea.sflag [#allocation6], 1
    %347 = vsyncpa %s346, 1
    %348 = vsyncpa [#allocation4], 1
    %s349 = scalar_lea.sflag [#allocation4], 1
    %350 = vsyncpa %s349, 1

</llo_original>
